<compile_context>
chip_gen: v7x
topology: tpu7x:2x2x1
jax: 0.10.0
libtpu: 0.0.40
codegen_flags: <defaults>
</compile_context>

<pallas_src>
import math

import jax
import jax.numpy as jnp
from jax.experimental import pallas as pl
from jax.experimental.pallas import tpu as pltpu

SUBLANE = 8
H1, H2, H3 = 256, 256, 128


def _round_up(x, m):
    return (x + m - 1) // m * m


def _pick_tile_m(B):
    """Batch-tile selection.

    Small batches: one tile of round_up(B, 8) rows (per-grid-step overhead is
    the whole cost, so never split).  Large batches: 512-1024-row tiles, but
    always >= 2 grid steps so the "parallel" batch axis can feed both
    TensorCores on v7x.
    """
    b8 = _round_up(B, SUBLANE)
    if b8 <= 512:
        return b8
    n_tiles = max(2, pl.cdiv(b8, 1024))
    return _round_up(pl.cdiv(b8, n_tiles), SUBLANE)


def dqn_kernel(x_ref,
               w1_ref, b1_ref,
               w2_ref, b2_ref,
               w3_ref, b3_ref,
               w4_ref, b4_ref,
               out_ref):
    # Four MXU matmuls (bf16 operands, f32 accumulate); bias + ReLU run on the
    # VPU in f32 and the result is immediately narrowed to bf16 so only the
    # bf16 form stays live between layers.
    x = x_ref[...]                                              # already bf16
    h = jnp.dot(x, w1_ref[...], preferred_element_type=jnp.float32) + b1_ref[...]
    h = jnp.maximum(h, 0.0).astype(jnp.bfloat16)
    h = jnp.dot(h, w2_ref[...], preferred_element_type=jnp.float32) + b2_ref[...]
    h = jnp.maximum(h, 0.0).astype(jnp.bfloat16)
    h = jnp.dot(h, w3_ref[...], preferred_element_type=jnp.float32) + b3_ref[...]
    h = jnp.maximum(h, 0.0).astype(jnp.bfloat16)
    out_ref[...] = (jnp.dot(h, w4_ref[...], preferred_element_type=jnp.float32)
                    + b4_ref[...])


def dqn_forward(state, params, action_size, tile_m=None):
    """state: (B, state_size) f32/bf16.  Returns (B, action_size) f32."""
    B, s = state.shape
    k_pad = params["w1t"].shape[0]           # state_size rounded up to 16 (bf16 packing)
    assert s <= k_pad

    tm = _pick_tile_m(B) if tile_m is None else min(tile_m, _round_up(B, SUBLANE))
    b_pad = _round_up(B, tm)

    # Cast to bf16 (halves x HBM traffic; kernel math is bf16 anyway) and pad
    # only what is strictly needed: batch to a tile multiple, features to the
    # 16-wide bf16 packing width.  For aligned inputs this is just the cast.
    x = state.astype(jnp.bfloat16)
    if b_pad != B or k_pad != s:
        x = jnp.zeros((b_pad, k_pad), jnp.bfloat16).at[:B, :s].set(x)

    const = lambda i: (0, 0)                 # weights/biases resident across grid steps

    flops = 2 * b_pad * (k_pad * H1 + H1 * H2 + H2 * H3 + H3 * action_size)
    bytes_accessed = (x.size * x.dtype.itemsize
                      + sum(v.size * v.dtype.itemsize for v in params.values())
                      + b_pad * action_size * 4)

    out = pl.pallas_call(
        dqn_kernel,
        out_shape=jax.ShapeDtypeStruct((b_pad, action_size), jnp.float32),
        grid=(b_pad // tm,),
        in_specs=[
            pl.BlockSpec((tm, k_pad), lambda i: (i, 0)),       # x: tiled over batch
            pl.BlockSpec((k_pad, H1), const), pl.BlockSpec((1, H1), const),
            pl.BlockSpec((H1, H2), const),    pl.BlockSpec((1, H2), const),
            pl.BlockSpec((H2, H3), const),    pl.BlockSpec((1, H3), const),
            pl.BlockSpec((H3, action_size), const),
            pl.BlockSpec((1, action_size), const),
        ],
        out_specs=pl.BlockSpec((tm, action_size), lambda i: (i, 0)),
        compiler_params=pltpu.CompilerParams(
            dimension_semantics=("parallel",)),                # v7x: batch on 2 TCs
        cost_estimate=pl.CostEstimate(flops=flops, transcendentals=0,
                                      bytes_accessed=bytes_accessed),
    )(x,
      params["w1t"], params["b1"],
      params["w2t"], params["b2"],
      params["w3t"], params["b3"],
      params["w4t"], params["b4"])

    return out if b_pad == B else out[:B]


def init_params(key, state_size, action_size):
    """nn.Linear default init U(-1/sqrt(fan_in), +1/sqrt(fan_in)).

    Weights are stored pre-transposed as (in, out) so the kernel computes
    x @ W^T + b exactly like nn.Linear.  Only the first layer's input dim is
    padded (to a multiple of 16, the bf16 sublane-packing width); hidden and
    output dims keep their true sizes.  Weights are bf16 (MXU operands),
    biases stay f32.
    """
    k_pad = _round_up(state_size, 16)
    dims = [(state_size, H1), (H1, H2), (H2, H3), (H3, action_size)]
    in_pad = [k_pad, H1, H2, H3]

    params = {}
    for i, ((fi, fo), pfi) in enumerate(zip(dims, in_pad), start=1):
        key, kw, kb = jax.random.split(key, 3)
        bound = 1.0 / math.sqrt(fi)
        w = jax.random.uniform(kw, (fi, fo), jnp.float32, -bound, bound)
        b = jax.random.uniform(kb, (1, fo), jnp.float32, -bound, bound)
        if pfi != fi:
            w = jnp.zeros((pfi, fo), jnp.float32).at[:fi, :].set(w)
        params[f"w{i}t"] = w.astype(jnp.bfloat16)
        params[f"b{i}"] = b
    return params


def dqn_reference(state, params, action_size):
    """Pure-JAX reference using the same bf16-weight / f32-accumulate math."""
    B, s = state.shape
    k_pad = params["w1t"].shape[0]
    x = state.astype(jnp.bfloat16)
    if k_pad != s:
        x = jnp.zeros((B, k_pad), jnp.bfloat16).at[:, :s].set(x)

    def layer(h, w, b, relu=True):
        y = jnp.dot(h, w, preferred_element_type=jnp.float32) + b
        return jnp.maximum(y, 0.0).astype(jnp.bfloat16) if relu else y

    h = layer(x, params["w1t"], params["b1"])
    h = layer(h, params["w2t"], params["b2"])
    h = layer(h, params["w3t"], params["b3"])
    return layer(h, params["w4t"], params["b4"], relu=False)


if __name__ == "__main__":
    key = jax.random.PRNGKey(0)
    state_size, action_size = 32, 4

    kp, kx1, kx2 = jax.random.split(key, 3)
    params = init_params(kp, state_size, action_size)

    # Small batch: single-tile path.
    state = jax.random.normal(kx1, (8, state_size), jnp.float32)
    out = jax.block_until_ready(dqn_forward(state, params, action_size))
    ref = dqn_reference(state, params, action_size)
    assert out.shape == (8, action_size)
    assert jnp.allclose(out, ref, atol=2e-2, rtol=2e-2), (
        f"max abs err {jnp.max(jnp.abs(out - ref))}")

    # Larger batch: multi-tile path (batch padding + 2-step parallel grid).
    state_l = jax.random.normal(kx2, (600, state_size), jnp.float32)
    out_l = jax.block_until_ready(dqn_forward(state_l, params, action_size))
    ref_l = dqn_reference(state_l, params, action_size)
    assert out_l.shape == (600, action_size)
    assert jnp.allclose(out_l, ref_l, atol=2e-2, rtol=2e-2), (
        f"max abs err {jnp.max(jnp.abs(out_l - ref_l))}")

    print("KERNEL_OK")
</pallas_src>

<mosaic_0001>
module attributes {stable_mosaic.version = 11 : i64} {
  func.func @dqn_kernel(%arg0: i32, %arg1: memref<8x32xbf16, #tpu.memory_space<vmem>>, %arg2: memref<32x256xbf16, #tpu.memory_space<vmem>>, %arg3: memref<1x256xf32, #tpu.memory_space<vmem>>, %arg4: memref<256x256xbf16, #tpu.memory_space<vmem>>, %arg5: memref<1x256xf32, #tpu.memory_space<vmem>>, %arg6: memref<256x128xbf16, #tpu.memory_space<vmem>>, %arg7: memref<1x128xf32, #tpu.memory_space<vmem>>, %arg8: memref<128x4xbf16, #tpu.memory_space<vmem>>, %arg9: memref<1x4xf32, #tpu.memory_space<vmem>>, %arg10: memref<8x4xf32, #tpu.memory_space<vmem>>) attributes {dimension_semantics = [#tpu.dimension_semantics<parallel>], iteration_bounds = array<i64: 1>, scalar_prefetch = 0 : i64, scratch_operands = 0 : i64, tpu.core_type = #tpu.core_type<tc>, window_params = [{transform_indices = @transform_0, window_bounds = array<i64: 8, 32>}, {pipeline_mode = #tpu.pipeline_mode<synchronous>, transform_indices = @transform_1, window_bounds = array<i64: 32, 256>}, {pipeline_mode = #tpu.pipeline_mode<synchronous>, transform_indices = @transform_2, window_bounds = array<i64: 1, 256>}, {pipeline_mode = #tpu.pipeline_mode<synchronous>, transform_indices = @transform_3, window_bounds = array<i64: 256, 256>}, {pipeline_mode = #tpu.pipeline_mode<synchronous>, transform_indices = @transform_4, window_bounds = array<i64: 1, 256>}, {pipeline_mode = #tpu.pipeline_mode<synchronous>, transform_indices = @transform_5, window_bounds = array<i64: 256, 128>}, {pipeline_mode = #tpu.pipeline_mode<synchronous>, transform_indices = @transform_6, window_bounds = array<i64: 1, 128>}, {pipeline_mode = #tpu.pipeline_mode<synchronous>, transform_indices = @transform_7, window_bounds = array<i64: 128, 4>}, {pipeline_mode = #tpu.pipeline_mode<synchronous>, transform_indices = @transform_8, window_bounds = array<i64: 1, 4>}, {transform_indices = @transform_9, window_bounds = array<i64: 8, 4>}]} {
    %c0 = arith.constant 0 : index
    %c0_0 = arith.constant 0 : index
    %0 = vector.load %arg1[%c0, %c0_0] : memref<8x32xbf16, #tpu.memory_space<vmem>>, vector<8x32xbf16>
    %c0_1 = arith.constant 0 : index
    %c0_2 = arith.constant 0 : index
    %1 = vector.load %arg2[%c0_1, %c0_2] : memref<32x256xbf16, #tpu.memory_space<vmem>>, vector<32x256xbf16>
    %cst = arith.constant dense<0.000000e+00> : vector<8x256xf32>
    %2 = tpu.matmul %0, %1, %cst {dimension_numbers = #tpu.dot_dimension_numbers<[1], [0], [0], [1], [0, 0, 1, 1], [], []>} : vector<8x32xbf16>, vector<32x256xbf16>, vector<8x256xf32> -> vector<8x256xf32>
    %c0_3 = arith.constant 0 : index
    %c0_4 = arith.constant 0 : index
    %3 = vector.load %arg3[%c0_3, %c0_4] : memref<1x256xf32, #tpu.memory_space<vmem>>, vector<1x256xf32>
    %4 = vector.broadcast %3 : vector<1x256xf32> to vector<8x256xf32>
    %5 = arith.addf %2, %4 : vector<8x256xf32>
    %cst_5 = arith.constant 0.000000e+00 : f32
    %6 = vector.broadcast %cst_5 : f32 to vector<8x256xf32>
    %7 = arith.maximumf %5, %6 : vector<8x256xf32>
    %8 = arith.truncf %7 : vector<8x256xf32> to vector<8x256xbf16>
    %c0_6 = arith.constant 0 : index
    %c0_7 = arith.constant 0 : index
    %9 = vector.load %arg4[%c0_6, %c0_7] : memref<256x256xbf16, #tpu.memory_space<vmem>>, vector<256x256xbf16>
    %cst_8 = arith.constant dense<0.000000e+00> : vector<8x256xf32>
    %10 = tpu.matmul %8, %9, %cst_8 {dimension_numbers = #tpu.dot_dimension_numbers<[1], [0], [0], [1], [0, 0, 1, 1], [], []>} : vector<8x256xbf16>, vector<256x256xbf16>, vector<8x256xf32> -> vector<8x256xf32>
    %c0_9 = arith.constant 0 : index
    %c0_10 = arith.constant 0 : index
    %11 = vector.load %arg5[%c0_9, %c0_10] : memref<1x256xf32, #tpu.memory_space<vmem>>, vector<1x256xf32>
    %12 = vector.broadcast %11 : vector<1x256xf32> to vector<8x256xf32>
    %13 = arith.addf %10, %12 : vector<8x256xf32>
    %cst_11 = arith.constant 0.000000e+00 : f32
    %14 = vector.broadcast %cst_11 : f32 to vector<8x256xf32>
    %15 = arith.maximumf %13, %14 : vector<8x256xf32>
    %16 = arith.truncf %15 : vector<8x256xf32> to vector<8x256xbf16>
    %c0_12 = arith.constant 0 : index
    %c0_13 = arith.constant 0 : index
    %17 = vector.load %arg6[%c0_12, %c0_13] : memref<256x128xbf16, #tpu.memory_space<vmem>>, vector<256x128xbf16>
    %cst_14 = arith.constant dense<0.000000e+00> : vector<8x128xf32>
    %18 = tpu.matmul %16, %17, %cst_14 {dimension_numbers = #tpu.dot_dimension_numbers<[1], [0], [0], [1], [0, 0, 1, 1], [], []>} : vector<8x256xbf16>, vector<256x128xbf16>, vector<8x128xf32> -> vector<8x128xf32>
    %c0_15 = arith.constant 0 : index
    %c0_16 = arith.constant 0 : index
    %19 = vector.load %arg7[%c0_15, %c0_16] : memref<1x128xf32, #tpu.memory_space<vmem>>, vector<1x128xf32>
    %20 = vector.broadcast %19 : vector<1x128xf32> to vector<8x128xf32>
    %21 = arith.addf %18, %20 : vector<8x128xf32>
    %cst_17 = arith.constant 0.000000e+00 : f32
    %22 = vector.broadcast %cst_17 : f32 to vector<8x128xf32>
    %23 = arith.maximumf %21, %22 : vector<8x128xf32>
    %24 = arith.truncf %23 : vector<8x128xf32> to vector<8x128xbf16>
    %c0_18 = arith.constant 0 : index
    %c0_19 = arith.constant 0 : index
    %25 = vector.load %arg8[%c0_18, %c0_19] : memref<128x4xbf16, #tpu.memory_space<vmem>>, vector<128x4xbf16>
    %cst_20 = arith.constant dense<0.000000e+00> : vector<8x4xf32>
    %26 = tpu.matmul %24, %25, %cst_20 {dimension_numbers = #tpu.dot_dimension_numbers<[1], [0], [0], [1], [0, 0, 1, 1], [], []>} : vector<8x128xbf16>, vector<128x4xbf16>, vector<8x4xf32> -> vector<8x4xf32>
    %c0_21 = arith.constant 0 : index
    %c0_22 = arith.constant 0 : index
    %27 = vector.load %arg9[%c0_21, %c0_22] : memref<1x4xf32, #tpu.memory_space<vmem>>, vector<1x4xf32>
    %28 = vector.broadcast %27 : vector<1x4xf32> to vector<8x4xf32>
    %29 = arith.addf %26, %28 : vector<8x4xf32>
    %c0_23 = arith.constant 0 : index
    %c0_24 = arith.constant 0 : index
    %30 = vector.load %arg10[%c0_23, %c0_24] : memref<8x4xf32, #tpu.memory_space<vmem>>, vector<8x4xf32>
    tpu.vector_store %arg10[%c0_23, %c0_24], %29 {strides = array<i32>} : memref<8x4xf32, #tpu.memory_space<vmem>>, vector<8x4xf32>,
    return
  }
  func.func @transform_0(%arg0: i32) -> (i32, i32) {
    %c0_i32 = arith.constant 0 : i32
    %c0_i32_0 = arith.constant 0 : i32
    return %arg0, %c0_i32 : i32, i32
  }
  func.func @transform_1(%arg0: i32) -> (i32, i32) {
    %c0_i32 = arith.constant 0 : i32
    %c0_i32_0 = arith.constant 0 : i32
    %c0_i32_1 = arith.constant 0 : i32
    return %c0_i32, %c0_i32_0 : i32, i32
  }
  func.func @transform_2(%arg0: i32) -> (i32, i32) {
    %c0_i32 = arith.constant 0 : i32
    %c0_i32_0 = arith.constant 0 : i32
    %c0_i32_1 = arith.constant 0 : i32
    return %c0_i32, %c0_i32_0 : i32, i32
  }
  func.func @transform_3(%arg0: i32) -> (i32, i32) {
    %c0_i32 = arith.constant 0 : i32
    %c0_i32_0 = arith.constant 0 : i32
    %c0_i32_1 = arith.constant 0 : i32
    return %c0_i32, %c0_i32_0 : i32, i32
  }
  func.func @transform_4(%arg0: i32) -> (i32, i32) {
    %c0_i32 = arith.constant 0 : i32
    %c0_i32_0 = arith.constant 0 : i32
    %c0_i32_1 = arith.constant 0 : i32
    return %c0_i32, %c0_i32_0 : i32, i32
  }
  func.func @transform_5(%arg0: i32) -> (i32, i32) {
    %c0_i32 = arith.constant 0 : i32
    %c0_i32_0 = arith.constant 0 : i32
    %c0_i32_1 = arith.constant 0 : i32
    return %c0_i32, %c0_i32_0 : i32, i32
  }
  func.func @transform_6(%arg0: i32) -> (i32, i32) {
    %c0_i32 = arith.constant 0 : i32
    %c0_i32_0 = arith.constant 0 : i32
    %c0_i32_1 = arith.constant 0 : i32
    return %c0_i32, %c0_i32_0 : i32, i32
  }
  func.func @transform_7(%arg0: i32) -> (i32, i32) {
    %c0_i32 = arith.constant 0 : i32
    %c0_i32_0 = arith.constant 0 : i32
    %c0_i32_1 = arith.constant 0 : i32
    return %c0_i32, %c0_i32_0 : i32, i32
  }
  func.func @transform_8(%arg0: i32) -> (i32, i32) {
    %c0_i32 = arith.constant 0 : i32
    %c0_i32_0 = arith.constant 0 : i32
    %c0_i32_1 = arith.constant 0 : i32
    return %c0_i32, %c0_i32_0 : i32, i32
  }
  func.func @transform_9(%arg0: i32) -> (i32, i32) {
    %c0_i32 = arith.constant 0 : i32
    %c0_i32_0 = arith.constant 0 : i32
    return %arg0, %c0_i32 : i32, i32
  }
}

</mosaic_0001>

<llo_original>
// kernel: tpu_custom_call.1
$region0: #{tpu_custom_call.1}
  #allocation0 [shape = 'u32[]', space=smem, size = 0x4, offset = 0x4, fixed_abs, tag = 'smem constant byte address 0x4 - core index']
  #allocation1 [shape = 'u32[144,128]{1,0:T(1,128)}', space=vmem, size = 0x12000, scoped, tag = 'internal scratch']
  %s0 = inlined_call_operand.vmem [shape: bf16[8,32], index: 0, kind: input, shape index: {}]
  %s1 = inlined_call_operand.vmem [shape: bf16[32,256], index: 1, kind: input, shape index: {}]
  %s2 = inlined_call_operand.vmem [shape: f32[1,256], index: 2, kind: input, shape index: {}]
  %s3 = inlined_call_operand.hbm [shape: bf16[256,256], index: 3, kind: input, shape index: {}]
  %s4 = inlined_call_operand.vmem [shape: f32[1,256], index: 4, kind: input, shape index: {}]
  %s5 = inlined_call_operand.hbm [shape: bf16[256,128], index: 5, kind: input, shape index: {}]
  %s6 = inlined_call_operand.vmem [shape: f32[1,128], index: 6, kind: input, shape index: {}]
  %s7 = inlined_call_operand.vmem [shape: bf16[128,4], index: 7, kind: input, shape index: {}]
  %s8 = inlined_call_operand.vmem [shape: f32[1,4], index: 8, kind: input, shape index: {}]
  %s9 = inlined_call_operand.vmem [shape: f32[8,4], index: 9, kind: output, shape index: {}]
  %s10 = sld [smem:[#allocation0]]
  $region54: #{tpu_custom_call.1} parent=0
    _
  %s12 = ssub.s32 1, %s10
  %s13 = scalar_select 0, %s12, %s10
  $region1: #{tpu_custom_call.1} parent=0
    #allocation2 [shape = 'u8[131072]{0}', space=vmem, size = 0x20000, scoped, tag = 'input window, operand 3, single buffered']
    #allocation3 [shape = 's32[1]{0}', space=sflag, size = 0x4, scoped, tag = 'scoped memory for tpu_custom_call.1']
    #allocation4 [shape = 'u8[65536]{0}', space=vmem, size = 0x10000, scoped, tag = 'input window, operand 5, single buffered']
    #allocation5 [shape = 's32[1]{0}', space=sflag, size = 0x4, scoped, tag = 'scoped memory for tpu_custom_call.1']
    %14 = vsyncpa [#allocation3], 0
    %15 = vsyncpa [#allocation5], 0
    // Predicated region
    $region2: #{tpu_custom_call.1} parent=1 // pred_check
      _
    $region3: #{tpu_custom_call.1} parent=1 // pred_check_branch
      %17 = sbr.rel (0) target = $region5
    $region4: #{tpu_custom_call.1} parent=1 // pred_region
      _
    $region5: #{tpu_custom_call.1} parent=1 // pred_fallthru
      _
    // Predicated region
    $region6: #{tpu_custom_call.1} parent=1 // pred_check
      _
    $region7: #{tpu_custom_call.1} parent=1 // pred_check_branch
      %19 = sbr.rel (0) target = $region9
    $region8: #{tpu_custom_call.1} parent=1 // pred_region
      _
    $region9: #{tpu_custom_call.1} parent=1 // pred_fallthru
      _
    // Predicated region
    $region10: #{tpu_custom_call.1} parent=1 // pred_check
      _
    $region11: #{tpu_custom_call.1} parent=1 // pred_check_branch
      %21 = sbr.rel (0) target = $region13
    $region12: #{tpu_custom_call.1} parent=1 // pred_region
      _
    $region13: #{tpu_custom_call.1} parent=1 // pred_fallthru
      _
    // Predicated region
    $region14: #{tpu_custom_call.1} parent=1 // pred_check
      _
    $region15: #{tpu_custom_call.1} parent=1 // pred_check_branch
      %23 = sbr.rel (0) target = $region17
    $region16: #{tpu_custom_call.1} parent=1 // pred_region
      %s25 = ssub.s32 4096, 4096
      %26 = vsyncadd [#allocation3], %s25
      %s27 = sshll.u32 [#allocation2], 4
      %s28 = int_to_ptr.vmem [resolvable:$true] %s27
      %33 = dma.hbm_to_vmem [thread:$0]  %s3, 4096, %s28, [#allocation3], 128, 128, 8
    $region17: #{tpu_custom_call.1} parent=1 // pred_fallthru
      _
    // Predicated region
    $region18: #{tpu_custom_call.1} parent=1 // pred_check
      _
    $region19: #{tpu_custom_call.1} parent=1 // pred_check_branch
      %35 = sbr.rel (0) target = $region21
    $region20: #{tpu_custom_call.1} parent=1 // pred_region
      _
    $region21: #{tpu_custom_call.1} parent=1 // pred_fallthru
      _
    // Predicated region
    $region22: #{tpu_custom_call.1} parent=1 // pred_check
      _
    $region23: #{tpu_custom_call.1} parent=1 // pred_check_branch
      %37 = sbr.rel (0) target = $region25
    $region24: #{tpu_custom_call.1} parent=1 // pred_region
      %s39 = ssub.s32 2048, 2048
      %40 = vsyncadd [#allocation5], %s39
      %s41 = sshll.u32 [#allocation4], 4
      %s42 = int_to_ptr.vmem [resolvable:$true] %s41
      %47 = dma.hbm_to_vmem [thread:$0]  %s5, 2048, %s42, [#allocation5], 64, 64, 4
    $region25: #{tpu_custom_call.1} parent=1 // pred_fallthru
      _
    // Predicated region
    $region26: #{tpu_custom_call.1} parent=1 // pred_check
      _
    $region27: #{tpu_custom_call.1} parent=1 // pred_check_branch
      %49 = sbr.rel (0) target = $region29
    $region28: #{tpu_custom_call.1} parent=1 // pred_region
      _
    $region29: #{tpu_custom_call.1} parent=1 // pred_fallthru
      _
    // Predicated region
    $region30: #{tpu_custom_call.1} parent=1 // pred_check
      _
    $region31: #{tpu_custom_call.1} parent=1 // pred_check_branch
      %51 = sbr.rel (0) target = $region33
    $region32: #{tpu_custom_call.1} parent=1 // pred_region
      _
    $region33: #{tpu_custom_call.1} parent=1 // pred_fallthru
      _
    // Predicated region
    $region34: #{tpu_custom_call.1} parent=1 // pred_check
      _
    $region35: #{tpu_custom_call.1} parent=1 // pred_check_branch
      %53 = sbr.rel (0) target = $region37
    $region36: #{tpu_custom_call.1} parent=1 // pred_region
      _
    $region37: #{tpu_custom_call.1} parent=1 // pred_fallthru
      _
    // Predicated region
    $region38: #{tpu_custom_call.1} parent=1 // pred_check
      _
    $region39: #{tpu_custom_call.1} parent=1 // pred_check_branch
      %55 = sbr.rel (0) target = $region41
    $region40: #{tpu_custom_call.1} parent=1 // pred_region
      %56 = dma.done [#allocation3], 4096
    $region41: #{tpu_custom_call.1} parent=1 // pred_fallthru
      _
    // Predicated region
    $region42: #{tpu_custom_call.1} parent=1 // pred_check
      _
    $region43: #{tpu_custom_call.1} parent=1 // pred_check_branch
      %58 = sbr.rel (0) target = $region45
    $region44: #{tpu_custom_call.1} parent=1 // pred_region
      %59 = dma.done [#allocation5], 2048
    $region45: #{tpu_custom_call.1} parent=1 // pred_fallthru
      _
    %v61 = vld [vmem:[%s0] sm:$0xf]
    %v62 = vld [vmem:[%s1] sm:$0xff]
    %v63 = vld [vmem:[%s1 + $0x8] sm:$0xff]
    %v64 = vld [vmem:[%s1 + $0x10] sm:$0xff]
    %v65 = vld [vmem:[%s1 + $0x18] sm:$0xff]
    %v66 = vld [vmem:[%s2] sm:$0x3]
    %v68 = vlaneseq
    %v69 = vshrl.u32 %v68, 7
    %v70 = vsub.s32 0, %v69
    %v71 = vrot.slane %v66, %v70
    %v72 = vlaneseq
    %v73 = vshrl.u32 %v72, 7
    %v74 = vsub.s32 1, %v73
    %v75 = vrot.slane %v66, %v74
    %v82 = vunpack.c.l.b16 %v62
    %v83 = vunpack.c.h.b16 %v62
    %v84 = vunpack.c.l.b16 %v63
    %v85 = vunpack.c.h.b16 %v63
    %v86 = vunpack.c.l.b16 %v64
    %v87 = vunpack.c.h.b16 %v64
    %v88 = vunpack.c.l.b16 %v65
    %v89 = vunpack.c.h.b16 %v65
    %v90 = vpack.c.b16 %v84, %v82
    %v91 = vpack.c.b16 %v85, %v83
    %v92 = vpack.c.b16 %v88, %v86
    %v93 = vpack.c.b16 %v89, %v87
    %vm98 = vcmask 261120
    %v100 = vsel %vm98, %v61, 0
    %102 = vmatprep.subr.bf16.mxu0 %v91
    %103 = vmatpush1.bf16.msra.mxu0 %v90
    %104 = vmatprep.subr.bf16.mxu0 %v93
    %105 = vmatpush1.bf16.msra.mxu0 %v92
    %106 = vmatprep.subr.bf16.mxu0 0
    %107 = vmatpush1.bf16.msra.mxu0 0
    %108 = vmatprep.subr.bf16.mxu0 0
    %109 = vmatpush1.bf16.msra.mxu0 0
    %110 = vmatprep.subr.bf16.mxu0 0
    %111 = vmatpush1.bf16.msra.mxu0 0
    %112 = vmatprep.subr.bf16.mxu0 0
    %113 = vmatpush1.bf16.msra.mxu0 0
    %114 = vmatprep.subr.bf16.mxu0 0
    %115 = vmatpush1.bf16.msra.mxu0 0
    %116 = vmatprep.subr.bf16.mxu0 0
    %117 = vmatpush1.bf16.msra.mxu0 0
    %118 = vmatprep.subr.bf16.mxu0 0
    %119 = vmatpush1.bf16.msra.mxu0 0
    %120 = vmatprep.subr.bf16.mxu0 0
    %121 = vmatpush1.bf16.msra.mxu0 0
    %122 = vmatprep.subr.bf16.mxu0 0
    %123 = vmatpush1.bf16.msra.mxu0 0
    %124 = vmatprep.subr.bf16.mxu0 0
    %125 = vmatpush1.bf16.msra.mxu0 0
    %126 = vmatprep.subr.bf16.mxu0 0
    %127 = vmatpush1.bf16.msra.mxu0 0
    %128 = vmatprep.subr.bf16.mxu0 0
    %129 = vmatpush1.bf16.msra.mxu0 0
    %130 = vmatprep.subr.bf16.mxu0 0
    %131 = vmatpush1.bf16.msra.mxu0 0
    %132 = vmatprep.subr.bf16.mxu0 0
    %133 = vmatpush1.bf16.msra.mxu0 0
    %134 = vmatprep.mubr.bf16.mxu0 0
    %135 = vmatmul.mubr.bf16.gmra.mrb[0].mxu0 %v100
    %v136 = vpop.f32.mrb[0].mxu0
    %v137 = vadd.f32 %v71, %v136
    %v138 = vpop.f32.mrb[0].mxu0
    %v139 = vadd.f32 %v75, %v138
    %v140 = vpop.f32.mrb[0].mxu0
    %v141 = vpop.f32.mrb[0].mxu0
    %142 = vdwg.mxu0
    %v143 = vmax.f32 %v137, 0.0
    %v144 = vmax.f32 %v139, 0.0
    %v145 = vpack.c.bf16 %v143, %v143
    %v146 = vpack.c.bf16 %v144, %v144
    %v147 = vld [vmem:[#allocation2] sm:$0xff]
    %v148 = vld [vmem:[#allocation2 + $0x8] sm:$0xff]
    %v149 = vld [vmem:[#allocation2 + $0x10] sm:$0xff]
    %v150 = vld [vmem:[#allocation2 + $0x18] sm:$0xff]
    %v151 = vld [vmem:[#allocation2 + $0x20] sm:$0xff]
    %v152 = vld [vmem:[#allocation2 + $0x28] sm:$0xff]
    %v153 = vld [vmem:[#allocation2 + $0x30] sm:$0xff]
    %v154 = vld [vmem:[#allocation2 + $0x38] sm:$0xff]
    %v155 = vld [vmem:[#allocation2 + $0x40] sm:$0xff]
    %v156 = vld [vmem:[#allocation2 + $0x48] sm:$0xff]
    %v157 = vld [vmem:[#allocation2 + $0x50] sm:$0xff]
    %v158 = vld [vmem:[#allocation2 + $0x58] sm:$0xff]
    %v159 = vld [vmem:[#allocation2 + $0x60] sm:$0xff]
    %v160 = vld [vmem:[#allocation2 + $0x68] sm:$0xff]
    %v161 = vld [vmem:[#allocation2 + $0x70] sm:$0xff]
    %v162 = vld [vmem:[#allocation2 + $0x78] sm:$0xff]
    %v163 = vld [vmem:[#allocation2 + $0x80] sm:$0xff]
    %v164 = vld [vmem:[#allocation2 + $0x88] sm:$0xff]
    %v165 = vld [vmem:[#allocation2 + $0x90] sm:$0xff]
    %v166 = vld [vmem:[#allocation2 + $0x98] sm:$0xff]
    %v167 = vld [vmem:[#allocation2 + $0xa0] sm:$0xff]
    %v168 = vld [vmem:[#allocation2 + $0xa8] sm:$0xff]
    %v169 = vld [vmem:[#allocation2 + $0xb0] sm:$0xff]
    %v170 = vld [vmem:[#allocation2 + $0xb8] sm:$0xff]
    %v171 = vld [vmem:[#allocation2 + $0xc0] sm:$0xff]
    %v172 = vld [vmem:[#allocation2 + $0xc8] sm:$0xff]
    %v173 = vld [vmem:[#allocation2 + $0xd0] sm:$0xff]
    %v174 = vld [vmem:[#allocation2 + $0xd8] sm:$0xff]
    %v175 = vld [vmem:[#allocation2 + $0xe0] sm:$0xff]
    %v176 = vld [vmem:[#allocation2 + $0xe8] sm:$0xff]
    %v177 = vld [vmem:[#allocation2 + $0xf0] sm:$0xff]
    %v178 = vld [vmem:[#allocation2 + $0xf8] sm:$0xff]
    %v179 = vld [vmem:[%s4] sm:$0x3]
    %v181 = vlaneseq
    %v182 = vshrl.u32 %v181, 7
    %v183 = vsub.s32 0, %v182
    %v184 = vrot.slane %v179, %v183
    %v185 = vlaneseq
    %v186 = vshrl.u32 %v185, 7
    %v187 = vsub.s32 1, %v186
    %v188 = vrot.slane %v179, %v187
    %v223 = vunpack.c.l.b16 %v147
    %v224 = vunpack.c.h.b16 %v147
    %v225 = vunpack.c.l.b16 %v148
    %v226 = vunpack.c.h.b16 %v148
    %v227 = vunpack.c.l.b16 %v149
    %v228 = vunpack.c.h.b16 %v149
    %v229 = vunpack.c.l.b16 %v150
    %v230 = vunpack.c.h.b16 %v150
    %v231 = vunpack.c.l.b16 %v151
    %v232 = vunpack.c.h.b16 %v151
    %v233 = vunpack.c.l.b16 %v152
    %v234 = vunpack.c.h.b16 %v152
    %v235 = vunpack.c.l.b16 %v153
    %v236 = vunpack.c.h.b16 %v153
    %v237 = vunpack.c.l.b16 %v154
    %v238 = vunpack.c.h.b16 %v154
    %v239 = vunpack.c.l.b16 %v155
    %v240 = vunpack.c.h.b16 %v155
    %v241 = vunpack.c.l.b16 %v156
    %v242 = vunpack.c.h.b16 %v156
    %v243 = vunpack.c.l.b16 %v157
    %v244 = vunpack.c.h.b16 %v157
    %v245 = vunpack.c.l.b16 %v158
    %v246 = vunpack.c.h.b16 %v158
    %v247 = vunpack.c.l.b16 %v159
    %v248 = vunpack.c.h.b16 %v159
    %v249 = vunpack.c.l.b16 %v160
    %v250 = vunpack.c.h.b16 %v160
    %v251 = vunpack.c.l.b16 %v161
    %v252 = vunpack.c.h.b16 %v161
    %v253 = vunpack.c.l.b16 %v162
    %v254 = vunpack.c.h.b16 %v162
    %v255 = vunpack.c.l.b16 %v163
    %v256 = vunpack.c.h.b16 %v163
    %v257 = vunpack.c.l.b16 %v164
    %v258 = vunpack.c.h.b16 %v164
    %v259 = vunpack.c.l.b16 %v165
    %v260 = vunpack.c.h.b16 %v165
    %v261 = vunpack.c.l.b16 %v166
    %v262 = vunpack.c.h.b16 %v166
    %v263 = vunpack.c.l.b16 %v167
    %v264 = vunpack.c.h.b16 %v167
    %v265 = vunpack.c.l.b16 %v168
    %v266 = vunpack.c.h.b16 %v168
    %v267 = vunpack.c.l.b16 %v169
    %v268 = vunpack.c.h.b16 %v169
    %v269 = vunpack.c.l.b16 %v170
    %v270 = vunpack.c.h.b16 %v170
    %v271 = vunpack.c.l.b16 %v171
    %v272 = vunpack.c.h.b16 %v171
    %v273 = vunpack.c.l.b16 %v172
    %v274 = vunpack.c.h.b16 %v172
    %v275 = vunpack.c.l.b16 %v173
    %v276 = vunpack.c.h.b16 %v173
    %v277 = vunpack.c.l.b16 %v174
    %v278 = vunpack.c.h.b16 %v174
    %v279 = vunpack.c.l.b16 %v175
    %v280 = vunpack.c.h.b16 %v175
    %v281 = vunpack.c.l.b16 %v176
    %v282 = vunpack.c.h.b16 %v176
    %v283 = vunpack.c.l.b16 %v177
    %v284 = vunpack.c.h.b16 %v177
    %v285 = vunpack.c.l.b16 %v178
    %v286 = vunpack.c.h.b16 %v178
    %v287 = vpack.c.b16 %v225, %v223
    %v288 = vpack.c.b16 %v226, %v224
    %v289 = vpack.c.b16 %v229, %v227
    %v290 = vpack.c.b16 %v230, %v228
    %v291 = vpack.c.b16 %v233, %v231
    %v292 = vpack.c.b16 %v234, %v232
    %v293 = vpack.c.b16 %v237, %v235
    %v294 = vpack.c.b16 %v238, %v236
    %v295 = vpack.c.b16 %v241, %v239
    %v296 = vpack.c.b16 %v242, %v240
    %v297 = vpack.c.b16 %v245, %v243
    %v298 = vpack.c.b16 %v246, %v244
    %v299 = vpack.c.b16 %v249, %v247
    %v300 = vpack.c.b16 %v250, %v248
    %v301 = vpack.c.b16 %v253, %v251
    %v302 = vpack.c.b16 %v254, %v252
    %v303 = vpack.c.b16 %v257, %v255
    %v304 = vpack.c.b16 %v258, %v256
    %v305 = vpack.c.b16 %v261, %v259
    %v306 = vpack.c.b16 %v262, %v260
    %v307 = vpack.c.b16 %v265, %v263
    %v308 = vpack.c.b16 %v266, %v264
    %v309 = vpack.c.b16 %v269, %v267
    %v310 = vpack.c.b16 %v270, %v268
    %v311 = vpack.c.b16 %v273, %v271
    %v312 = vpack.c.b16 %v274, %v272
    %v313 = vpack.c.b16 %v277, %v275
    %v314 = vpack.c.b16 %v278, %v276
    %v315 = vpack.c.b16 %v281, %v279
    %v316 = vpack.c.b16 %v282, %v280
    %v317 = vpack.c.b16 %v285, %v283
    %v318 = vpack.c.b16 %v286, %v284
    %351 = vmatprep.subr.bf16.mxu0 %v288
    %352 = vmatpush1.bf16.msra.mxu0 %v287
    %353 = vmatprep.subr.bf16.mxu0 %v290
    %354 = vmatpush1.bf16.msra.mxu0 %v289
    %355 = vmatprep.subr.bf16.mxu0 %v292
    %356 = vmatpush1.bf16.msra.mxu0 %v291
    %357 = vmatprep.subr.bf16.mxu0 %v294
    %358 = vmatpush1.bf16.msra.mxu0 %v293
    %359 = vmatprep.subr.bf16.mxu0 %v296
    %360 = vmatpush1.bf16.msra.mxu0 %v295
    %361 = vmatprep.subr.bf16.mxu0 %v298
    %362 = vmatpush1.bf16.msra.mxu0 %v297
    %363 = vmatprep.subr.bf16.mxu0 %v300
    %364 = vmatpush1.bf16.msra.mxu0 %v299
    %365 = vmatprep.subr.bf16.mxu0 %v302
    %366 = vmatpush1.bf16.msra.mxu0 %v301
    %367 = vmatprep.subr.bf16.mxu0 %v304
    %368 = vmatpush1.bf16.msra.mxu0 %v303
    %369 = vmatprep.subr.bf16.mxu0 %v306
    %370 = vmatpush1.bf16.msra.mxu0 %v305
    %371 = vmatprep.subr.bf16.mxu0 %v308
    %372 = vmatpush1.bf16.msra.mxu0 %v307
    %373 = vmatprep.subr.bf16.mxu0 %v310
    %374 = vmatpush1.bf16.msra.mxu0 %v309
    %375 = vmatprep.subr.bf16.mxu0 %v312
    %376 = vmatpush1.bf16.msra.mxu0 %v311
    %377 = vmatprep.subr.bf16.mxu0 %v314
    %378 = vmatpush1.bf16.msra.mxu0 %v313
    %379 = vmatprep.subr.bf16.mxu0 %v316
    %380 = vmatpush1.bf16.msra.mxu0 %v315
    %381 = vmatprep.subr.bf16.mxu0 %v318
    %382 = vmatpush1.bf16.msra.mxu0 %v317
    %383 = vmatprep.mubr.bf16.mxu0 %v146
    %384 = vmatmul.mubr.bf16.gmra.mrb[0].mxu0 %v145
    %v385 = vpop.f32.mrb[0].mxu0
    %v386 = vadd.f32 %v184, %v385
    %v387 = vpop.f32.mrb[0].mxu0
    %v388 = vadd.f32 %v188, %v387
    %v389 = vpop.f32.mrb[0].mxu0
    %v390 = vpop.f32.mrb[0].mxu0
    %391 = vdwg.mxu0
    %v392 = vmax.f32 %v386, 0.0
    %v393 = vmax.f32 %v388, 0.0
    %v394 = vpack.c.bf16 %v392, %v392
    %v395 = vpack.c.bf16 %v393, %v393
    %v396 = vld [vmem:[#allocation4] sm:$0xf]
    %v397 = vld [vmem:[#allocation4 + $0x4] sm:$0xf]
    %v398 = vld [vmem:[#allocation4 + $0x8] sm:$0xf]
    %v399 = vld [vmem:[#allocation4 + $0xc] sm:$0xf]
    %v400 = vld [vmem:[#allocation4 + $0x10] sm:$0xf]
    %v401 = vld [vmem:[#allocation4 + $0x14] sm:$0xf]
    %v402 = vld [vmem:[#allocation4 + $0x18] sm:$0xf]
    %v403 = vld [vmem:[#allocation4 + $0x1c] sm:$0xf]
    %v404 = vld [vmem:[#allocation4 + $0x20] sm:$0xf]
    %v405 = vld [vmem:[#allocation4 + $0x24] sm:$0xf]
    %v406 = vld [vmem:[#allocation4 + $0x28] sm:$0xf]
    %v407 = vld [vmem:[#allocation4 + $0x2c] sm:$0xf]
    %v408 = vld [vmem:[#allocation4 + $0x30] sm:$0xf]
    %v409 = vld [vmem:[#allocation4 + $0x34] sm:$0xf]
    %v410 = vld [vmem:[#allocation4 + $0x38] sm:$0xf]
    %v411 = vld [vmem:[#allocation4 + $0x3c] sm:$0xf]
    %v412 = vld [vmem:[#allocation4 + $0x40] sm:$0xf]
    %v413 = vld [vmem:[#allocation4 + $0x44] sm:$0xf]
    %v414 = vld [vmem:[#allocation4 + $0x48] sm:$0xf]
    %v415 = vld [vmem:[#allocation4 + $0x4c] sm:$0xf]
    %v416 = vld [vmem:[#allocation4 + $0x50] sm:$0xf]
    %v417 = vld [vmem:[#allocation4 + $0x54] sm:$0xf]
    %v418 = vld [vmem:[#allocation4 + $0x58] sm:$0xf]
    %v419 = vld [vmem:[#allocation4 + $0x5c] sm:$0xf]
    %v420 = vld [vmem:[#allocation4 + $0x60] sm:$0xf]
    %v421 = vld [vmem:[#allocation4 + $0x64] sm:$0xf]
    %v422 = vld [vmem:[#allocation4 + $0x68] sm:$0xf]
    %v423 = vld [vmem:[#allocation4 + $0x6c] sm:$0xf]
    %v424 = vld [vmem:[#allocation4 + $0x70] sm:$0xf]
    %v425 = vld [vmem:[#allocation4 + $0x74] sm:$0xf]
    %v426 = vld [vmem:[#allocation4 + $0x78] sm:$0xf]
    %v427 = vld [vmem:[#allocation4 + $0x7c] sm:$0xf]
    %v428 = vld [vmem:[%s6] sm:$0x1]
    %v430 = vlaneseq
    %v431 = vshrl.u32 %v430, 7
    %v432 = vsub.s32 0, %v431
    %v433 = vrot.slane %v428, %v432
    %v467 = vunpack.c.l.b16 %v396
    %v468 = vunpack.c.l.b16 %v397
    %v469 = vunpack.c.l.b16 %v398
    %v470 = vunpack.c.l.b16 %v399
    %v471 = vunpack.c.l.b16 %v400
    %v472 = vunpack.c.l.b16 %v401
    %v473 = vunpack.c.l.b16 %v402
    %v474 = vunpack.c.l.b16 %v403
    %v475 = vunpack.c.l.b16 %v404
    %v476 = vunpack.c.l.b16 %v405
    %v477 = vunpack.c.l.b16 %v406
    %v478 = vunpack.c.l.b16 %v407
    %v479 = vunpack.c.l.b16 %v408
    %v480 = vunpack.c.l.b16 %v409
    %v481 = vunpack.c.l.b16 %v410
    %v482 = vunpack.c.l.b16 %v411
    %v483 = vunpack.c.l.b16 %v412
    %v484 = vunpack.c.l.b16 %v413
    %v485 = vunpack.c.l.b16 %v414
    %v486 = vunpack.c.l.b16 %v415
    %v487 = vunpack.c.l.b16 %v416
    %v488 = vunpack.c.l.b16 %v417
    %v489 = vunpack.c.l.b16 %v418
    %v490 = vunpack.c.l.b16 %v419
    %v491 = vunpack.c.l.b16 %v420
    %v492 = vunpack.c.l.b16 %v421
    %v493 = vunpack.c.l.b16 %v422
    %v494 = vunpack.c.l.b16 %v423
    %v495 = vunpack.c.l.b16 %v424
    %v496 = vunpack.c.l.b16 %v425
    %v497 = vunpack.c.l.b16 %v426
    %v498 = vunpack.c.l.b16 %v427
    %v499 = vpack.c.b16 %v468, %v467
    %v500 = vpack.c.b16 %v470, %v469
    %v501 = vpack.c.b16 %v472, %v471
    %v502 = vpack.c.b16 %v474, %v473
    %v503 = vpack.c.b16 %v476, %v475
    %v504 = vpack.c.b16 %v478, %v477
    %v505 = vpack.c.b16 %v480, %v479
    %v506 = vpack.c.b16 %v482, %v481
    %v507 = vpack.c.b16 %v484, %v483
    %v508 = vpack.c.b16 %v486, %v485
    %v509 = vpack.c.b16 %v488, %v487
    %v510 = vpack.c.b16 %v490, %v489
    %v511 = vpack.c.b16 %v492, %v491
    %v512 = vpack.c.b16 %v494, %v493
    %v513 = vpack.c.b16 %v496, %v495
    %v514 = vpack.c.b16 %v498, %v497
    %531 = vmatprep.subr.bf16.mxu0 0
    %532 = vmatpush1.bf16.msra.mxu0 %v499
    %533 = vmatprep.subr.bf16.mxu0 0
    %534 = vmatpush1.bf16.msra.mxu0 %v500
    %535 = vmatprep.subr.bf16.mxu0 0
    %536 = vmatpush1.bf16.msra.mxu0 %v501
    %537 = vmatprep.subr.bf16.mxu0 0
    %538 = vmatpush1.bf16.msra.mxu0 %v502
    %539 = vmatprep.subr.bf16.mxu0 0
    %540 = vmatpush1.bf16.msra.mxu0 %v503
    %541 = vmatprep.subr.bf16.mxu0 0
    %542 = vmatpush1.bf16.msra.mxu0 %v504
    %543 = vmatprep.subr.bf16.mxu0 0
    %544 = vmatpush1.bf16.msra.mxu0 %v505
    %545 = vmatprep.subr.bf16.mxu0 0
    %546 = vmatpush1.bf16.msra.mxu0 %v506
    %547 = vmatprep.subr.bf16.mxu0 0
    %548 = vmatpush1.bf16.msra.mxu0 %v507
    %549 = vmatprep.subr.bf16.mxu0 0
    %550 = vmatpush1.bf16.msra.mxu0 %v508
    %551 = vmatprep.subr.bf16.mxu0 0
    %552 = vmatpush1.bf16.msra.mxu0 %v509
    %553 = vmatprep.subr.bf16.mxu0 0
    %554 = vmatpush1.bf16.msra.mxu0 %v510
    %555 = vmatprep.subr.bf16.mxu0 0
    %556 = vmatpush1.bf16.msra.mxu0 %v511
    %557 = vmatprep.subr.bf16.mxu0 0
    %558 = vmatpush1.bf16.msra.mxu0 %v512
    %559 = vmatprep.subr.bf16.mxu0 0
    %560 = vmatpush1.bf16.msra.mxu0 %v513
    %561 = vmatprep.subr.bf16.mxu0 0
    %562 = vmatpush1.bf16.msra.mxu0 %v514
    %563 = vmatprep.mubr.bf16.mxu0 %v395
    %564 = vmatmul.mubr.bf16.gmra.mrb[0].mxu0 %v394
    %v565 = vpop.f32.mrb[0].mxu0
    %v566 = vadd.f32 %v433, %v565
    %v567 = vpop.f32.mrb[0].mxu0
    %v568 = vpop.f32.mrb[0].mxu0
    %v569 = vpop.f32.mrb[0].mxu0
    %570 = vdwg.mxu0
    %v571 = vmax.f32 %v566, 0.0
    %v572 = vpack.c.bf16 %v571, %v571
    %v573 = vld [vmem:[%s7] sm:$0xf]
    %v574 = vld [vmem:[%s7 + $0x4] sm:$0xf]
    %v575 = vld [vmem:[%s7 + $0x8] sm:$0xf]
    %v576 = vld [vmem:[%s7 + $0xc] sm:$0xf]
    %v577 = vld [vmem:[%s7 + $0x10] sm:$0xf]
    %v578 = vld [vmem:[%s7 + $0x14] sm:$0xf]
    %v579 = vld [vmem:[%s7 + $0x18] sm:$0xf]
    %v580 = vld [vmem:[%s7 + $0x1c] sm:$0xf]
    %v581 = vld [vmem:[%s7 + $0x20] sm:$0xf]
    %v582 = vld [vmem:[%s7 + $0x24] sm:$0xf]
    %v583 = vld [vmem:[%s7 + $0x28] sm:$0xf]
    %v584 = vld [vmem:[%s7 + $0x2c] sm:$0xf]
    %v585 = vld [vmem:[%s7 + $0x30] sm:$0xf]
    %v586 = vld [vmem:[%s7 + $0x34] sm:$0xf]
    %v587 = vld [vmem:[%s7 + $0x38] sm:$0xf]
    %v588 = vld [vmem:[%s7 + $0x3c] sm:$0xf]
    %v589 = vld [vmem:[%s8] sm:$0x1]
    %v591 = vlaneseq
    %v592 = vshrl.u32 %v591, 7
    %v593 = vsub.s32 0, %v592
    %v594 = vrot.slane %v589, %v593
    %v612 = vunpack.c.l.b16 %v573
    %v613 = vunpack.c.l.b16 %v574
    %v614 = vunpack.c.l.b16 %v575
    %v615 = vunpack.c.l.b16 %v576
    %v616 = vunpack.c.l.b16 %v577
    %v617 = vunpack.c.l.b16 %v578
    %v618 = vunpack.c.l.b16 %v579
    %v619 = vunpack.c.l.b16 %v580
    %v620 = vunpack.c.l.b16 %v581
    %v621 = vunpack.c.l.b16 %v582
    %v622 = vunpack.c.l.b16 %v583
    %v623 = vunpack.c.l.b16 %v584
    %v624 = vunpack.c.l.b16 %v585
    %v625 = vunpack.c.l.b16 %v586
    %v626 = vunpack.c.l.b16 %v587
    %v627 = vunpack.c.l.b16 %v588
    %v628 = vpack.c.b16 %v613, %v612
    %v629 = vpack.c.b16 %v615, %v614
    %v630 = vpack.c.b16 %v617, %v616
    %v631 = vpack.c.b16 %v619, %v618
    %v632 = vpack.c.b16 %v621, %v620
    %v633 = vpack.c.b16 %v623, %v622
    %v634 = vpack.c.b16 %v625, %v624
    %v635 = vpack.c.b16 %v627, %v626
    %644 = vmatprep.subr.bf16.mxu0 0
    %645 = vmatpush1.bf16.msra.mxu0 %v628
    %646 = vmatprep.subr.bf16.mxu0 0
    %647 = vmatpush1.bf16.msra.mxu0 %v629
    %648 = vmatprep.subr.bf16.mxu0 0
    %649 = vmatpush1.bf16.msra.mxu0 %v630
    %650 = vmatprep.subr.bf16.mxu0 0
    %651 = vmatpush1.bf16.msra.mxu0 %v631
    %652 = vmatprep.subr.bf16.mxu0 0
    %653 = vmatpush1.bf16.msra.mxu0 %v632
    %654 = vmatprep.subr.bf16.mxu0 0
    %655 = vmatpush1.bf16.msra.mxu0 %v633
    %656 = vmatprep.subr.bf16.mxu0 0
    %657 = vmatpush1.bf16.msra.mxu0 %v634
    %658 = vmatprep.subr.bf16.mxu0 0
    %659 = vmatpush1.bf16.msra.mxu0 %v635
    %660 = vmatprep.subr.bf16.mxu0 0
    %661 = vmatpush1.bf16.msra.mxu0 0
    %662 = vmatprep.subr.bf16.mxu0 0
    %663 = vmatpush1.bf16.msra.mxu0 0
    %664 = vmatprep.subr.bf16.mxu0 0
    %665 = vmatpush1.bf16.msra.mxu0 0
    %666 = vmatprep.subr.bf16.mxu0 0
    %667 = vmatpush1.bf16.msra.mxu0 0
    %668 = vmatprep.subr.bf16.mxu0 0
    %669 = vmatpush1.bf16.msra.mxu0 0
    %670 = vmatprep.subr.bf16.mxu0 0
    %671 = vmatpush1.bf16.msra.mxu0 0
    %672 = vmatprep.subr.bf16.mxu0 0
    %673 = vmatpush1.bf16.msra.mxu0 0
    %674 = vmatprep.subr.bf16.mxu0 0
    %675 = vmatpush1.bf16.msra.mxu0 0
    %676 = vmatprep.mubr.bf16.mxu0 0
    %677 = vmatmul.mubr.bf16.gmra.mrb[0].mxu0 %v572
    %v678 = vpop.f32.mrb[0].mxu0
    %v679 = vadd.f32 %v594, %v678
    %v680 = vpop.f32.mrb[0].mxu0
    %v681 = vpop.f32.mrb[0].mxu0
    %v682 = vpop.f32.mrb[0].mxu0
    %683 = vdwg.mxu0
    %vm684 = vcmask 31744
    %685 = vst.msk [vmem:[%s9] sm:$0xff] %vm684, %v679
    // Predicated region
    $region46: #{tpu_custom_call.1} parent=1 // pred_check
      _
    $region47: #{tpu_custom_call.1} parent=1 // pred_check_branch
      %687 = sbr.rel (0) target = $region49
    $region48: #{tpu_custom_call.1} parent=1 // pred_region
      _
    $region49: #{tpu_custom_call.1} parent=1 // pred_fallthru
      _
    // Predicated region
    $region50: #{tpu_custom_call.1} parent=1 // pred_check
      _
    $region51: #{tpu_custom_call.1} parent=1 // pred_check_branch
      %689 = sbr.rel (0) target = $region53
    $region52: #{tpu_custom_call.1} parent=1 // pred_region
      _
    $region53: #{tpu_custom_call.1} parent=1 // pred_fallthru
      _
    %690 = vsyncpa [#allocation3], 1
    %691 = vsyncpa [#allocation5], 1

</llo_original>
